<compile_context>
chip_gen: v5e
topology: v5e:2x2
jax: 0.10.0
libtpu: 0.0.40
codegen_flags: <defaults>
</compile_context>

<pallas_src>
import functools

import jax
import jax.numpy as jnp
from jax.experimental import pallas as pl
from jax.experimental.pallas import tpu as pltpu


# ----------------------------------------------------------------------------
# Fused kernel: BN1+ReLU -> 1x1 conv(+BN2 shift)+ReLU -> 3x3 conv(pad=1) -> concat
# ----------------------------------------------------------------------------
def _bottleneck_kernel(x_ref, s1_ref, t1_ref, w1_ref, t2_ref, w2_ref, mask_ref,
                       o_ref, *, W, C_in, TB):
    HW = x_ref.shape[-1]                       # padded lane width (mult of 128)
    s1 = s1_ref[...]                           # (C_in, 1) f32
    t1 = t1_ref[...]                           # (C_in, 1) f32
    t2 = t2_ref[...]                           # (C4, 1)  f32

    # Process TB images per grid step; static unroll keeps every op 2-D and
    # register pressure identical to the single-image case.
    for bi in range(TB):
        x = x_ref[bi]                                               # (C_in, HW) f32
        o_ref[bi, :C_in, :] = x                                     # passthrough rows

        # BN1 (folded scale/shift) + ReLU                           -- VPU (f32)
        y = jnp.maximum(x * s1 + t1, 0.0)

        # 1x1 conv (BN2 scale folded into weights) + BN2 shift + ReLU
        # bf16 operands, f32 accumulation                           -- MXU
        h = jnp.dot(w1_ref[...], y.astype(jnp.bfloat16),
                    preferred_element_type=jnp.float32)             # (C4, HW)
        h = jnp.maximum(h + t2, 0.0)

        # 3x3 conv, padding=1: per-tap accumulation.  Each tap is a lane roll
        # (XLU) + boundary mask (VPU, f32) and is contracted immediately with
        # its (G, C4) weight slice (MXU, bf16) -> only one tap live at a time.
        new = None
        for t in range(9):
            di = t // 3 - 1
            dj = t % 3 - 1
            delta = di * W + dj                 # flat-index shift of tap (di, dj)
            if delta == 0:
                tap = h
            else:
                # tap[c, p] = h[c, p + delta] when (h+di, w+dj) in bounds, else 0
                shifted = pltpu.roll(h, shift=(-delta) % HW, axis=1)
                tap = shifted * mask_ref[t:t + 1, :]
            contrib = jnp.dot(w2_ref[t], tap.astype(jnp.bfloat16),
                              preferred_element_type=jnp.float32)   # (G, HW)
            new = contrib if new is None else new + contrib

        # New-feature rows of the channel concat (lane-dense sublane store).
        o_ref[bi, C_in:, :] = new.astype(o_ref.dtype)


# ----------------------------------------------------------------------------
# Wrapper: fold BN, reshape/cast weights, launch one pallas_call over the batch
# ----------------------------------------------------------------------------
def bottleneck_forward(x, params, *, eps=1e-5, tb=None):
    """x: (B, C_in, H, W) float32 NCHW. Returns (B, C_in + growth, H, W)."""
    B, C_in, H, W = x.shape
    w1 = params["conv1_w"]                    # (4g, C_in, 1, 1)
    w2 = params["conv2_w"]                    # (g, 4g, 3, 3)
    C4 = w1.shape[0]
    G = w2.shape[0]
    HW = H * W
    C_out = C_in + G

    # Batch block size: default targets 2 grid steps (one per v7x TensorCore);
    # on v5e/v6e that is still only ~0.7us of per-step overhead total.
    if tb is None:
        tb = B // 2 if (B >= 2 and B % 2 == 0) else 1
    assert B % tb == 0, (B, tb)
    nb = B // tb

    # Fold inference BatchNorm into per-channel scale/shift (trace-time math).
    s1 = params["bn1_gamma"] * jax.lax.rsqrt(params["bn1_var"] + eps)
    t1 = params["bn1_beta"] - params["bn1_mean"] * s1
    s2 = params["bn2_gamma"] * jax.lax.rsqrt(params["bn2_var"] + eps)
    t2 = params["bn2_beta"] - params["bn2_mean"] * s2

    # Fold BN2's scale into conv1's weights; only the additive shift remains.
    w1_eff = (s2[:, None] * w1.reshape(C4, C_in)).astype(jnp.bfloat16)  # (C4, C_in)
    # Tap-split conv2 weight: w2_split[t] = w2[:, :, t//3, t%3], matching the
    # in-kernel tap order (t = kh*3 + kw).
    w2_split = jnp.transpose(w2, (2, 3, 0, 1)).reshape(9, G, C4).astype(jnp.bfloat16)

    # Pad the flattened spatial axis to a multiple of 128 lanes (no-op here)
    # so stores stay lane-dense at other resolutions.
    HW_pad = ((HW + 127) // 128) * 128
    x_flat = x.reshape(B, C_in, HW)                                # free reshape
    if HW_pad != HW:
        x_flat = jnp.pad(x_flat, ((0, 0), (0, 0), (0, HW_pad - HW)))

    # Precomputed boundary masks for the 9 taps (avoids in-kernel int div/mod).
    # Masked taps never read the pad region, so the padding is harmless.
    pos = jnp.arange(HW_pad, dtype=jnp.int32)
    hh = pos // W
    ww = pos % W
    masks = []
    for t in range(9):
        di = t // 3 - 1
        dj = t % 3 - 1
        m = ((hh + di >= 0) & (hh + di < H) & (ww + dj >= 0) & (ww + dj < W))
        masks.append(m.astype(jnp.float32))
    mask9 = jnp.stack(masks, axis=0)                               # (9, HW_pad)

    kernel = functools.partial(_bottleneck_kernel, W=W, C_in=C_in, TB=tb)
    out = pl.pallas_call(
        kernel,
        out_shape=jax.ShapeDtypeStruct((B, C_out, HW_pad), jnp.float32),
        grid=(nb,),
        in_specs=[
            pl.BlockSpec((tb, C_in, HW_pad), lambda b: (b, 0, 0)),  # x (TB images)
            pl.BlockSpec((C_in, 1), lambda b: (0, 0)),              # bn1 scale
            pl.BlockSpec((C_in, 1), lambda b: (0, 0)),              # bn1 shift
            pl.BlockSpec((C4, C_in), lambda b: (0, 0)),             # conv1 w (bf16, s2-folded)
            pl.BlockSpec((C4, 1), lambda b: (0, 0)),                # bn2 shift
            pl.BlockSpec((9, G, C4), lambda b: (0, 0, 0)),          # conv2 w, tap-split (bf16)
            pl.BlockSpec((9, HW_pad), lambda b: (0, 0)),            # tap boundary masks
        ],
        out_specs=pl.BlockSpec((tb, C_out, HW_pad), lambda b: (b, 0, 0)),
        compiler_params=pltpu.CompilerParams(
            dimension_semantics=("parallel",)),                     # shard batch over TCs
    )(x_flat,
      s1.reshape(C_in, 1).astype(jnp.float32),
      t1.reshape(C_in, 1).astype(jnp.float32),
      w1_eff,
      t2.reshape(C4, 1).astype(jnp.float32),
      w2_split,
      mask9)
    if HW_pad != HW:
        out = out[..., :HW]
    return out.reshape(B, C_out, H, W)


# ----------------------------------------------------------------------------
# Pure-JAX (XLA) reference for a correctness check
# ----------------------------------------------------------------------------
def _reference_forward(x, params, *, eps=1e-5):
    s1 = params["bn1_gamma"] * jax.lax.rsqrt(params["bn1_var"] + eps)
    t1 = params["bn1_beta"] - params["bn1_mean"] * s1
    s2 = params["bn2_gamma"] * jax.lax.rsqrt(params["bn2_var"] + eps)
    t2 = params["bn2_beta"] - params["bn2_mean"] * s2

    y = jnp.maximum(x * s1[None, :, None, None] + t1[None, :, None, None], 0.0)
    h = jax.lax.conv_general_dilated(
        y, params["conv1_w"], (1, 1), "VALID",
        dimension_numbers=("NCHW", "OIHW", "NCHW"),
        precision=jax.lax.Precision.HIGHEST)
    h = jnp.maximum(h * s2[None, :, None, None] + t2[None, :, None, None], 0.0)
    o = jax.lax.conv_general_dilated(
        h, params["conv2_w"], (1, 1), ((1, 1), (1, 1)),
        dimension_numbers=("NCHW", "OIHW", "NCHW"),
        precision=jax.lax.Precision.HIGHEST)
    return jnp.concatenate([x, o], axis=1)


def init_params(key, in_channels, growth_rate):
    c4 = 4 * growth_rate
    ks = jax.random.split(key, 10)

    def conv_init(k, shape, fan_in):
        return jax.random.normal(k, shape, jnp.float32) * (2.0 / fan_in) ** 0.5

    return {
        "bn1_gamma": jax.random.uniform(ks[0], (in_channels,), jnp.float32, 0.5, 1.5),
        "bn1_beta": 0.1 * jax.random.normal(ks[1], (in_channels,), jnp.float32),
        "bn1_mean": 0.1 * jax.random.normal(ks[2], (in_channels,), jnp.float32),
        "bn1_var": jax.random.uniform(ks[3], (in_channels,), jnp.float32, 0.5, 1.5),
        "conv1_w": conv_init(ks[4], (c4, in_channels, 1, 1), in_channels),
        "bn2_gamma": jax.random.uniform(ks[5], (c4,), jnp.float32, 0.5, 1.5),
        "bn2_beta": 0.1 * jax.random.normal(ks[6], (c4,), jnp.float32),
        "bn2_mean": 0.1 * jax.random.normal(ks[7], (c4,), jnp.float32),
        "bn2_var": jax.random.uniform(ks[8], (c4,), jnp.float32, 0.5, 1.5),
        "conv2_w": conv_init(ks[9], (growth_rate, c4, 3, 3), 9 * c4),
    }


if __name__ == "__main__":
    key = jax.random.PRNGKey(0)
    kx, kp = jax.random.split(key)

    B, C_in, H, W = 2, 16, 16, 16
    growth = 8                      # conv1: 16 -> 32, conv2: 32 -> 8, out: 24 ch

    x = jax.random.normal(kx, (B, C_in, H, W), jnp.float32)
    params = init_params(kp, C_in, growth)

    out = jax.block_until_ready(jax.jit(bottleneck_forward)(x, params))
    assert out.shape == (B, C_in + growth, H, W), out.shape
    assert bool(jnp.all(jnp.isfinite(out)))

    # Passthrough channels of the concat must be bit-exact.
    assert bool(jnp.array_equal(out[:, :C_in], x))

    ref = jax.block_until_ready(jax.jit(_reference_forward)(x, params))
    max_err = float(jnp.max(jnp.abs(out - ref)))
    # Kernel matmuls use bf16 inputs with f32 accumulation (per perf review),
    # so tolerance vs. the HIGHEST-precision f32 XLA reference is loosened.
    assert bool(jnp.allclose(out, ref, rtol=5e-2, atol=5e-2)), max_err

    print("KERNEL_OK")
</pallas_src>

<mosaic_0001>
module attributes {stable_mosaic.version = 11 : i64} {
  func.func @_bottleneck_kernel(%arg0: i32, %arg1: memref<1x16x256xf32, #tpu.memory_space<vmem>>, %arg2: memref<16x1xf32, #tpu.memory_space<vmem>>, %arg3: memref<16x1xf32, #tpu.memory_space<vmem>>, %arg4: memref<32x16xbf16, #tpu.memory_space<vmem>>, %arg5: memref<32x1xf32, #tpu.memory_space<vmem>>, %arg6: memref<9x8x32xbf16, #tpu.memory_space<vmem>>, %arg7: memref<9x256xf32, #tpu.memory_space<vmem>>, %arg8: memref<1x24x256xf32, #tpu.memory_space<vmem>>) attributes {dimension_semantics = [#tpu.dimension_semantics<parallel>], iteration_bounds = array<i64: 2>, scalar_prefetch = 0 : i64, scratch_operands = 0 : i64, tpu.core_type = #tpu.core_type<tc>, window_params = [{transform_indices = @transform_0, window_bounds = array<i64: 1, 16, 256>}, {pipeline_mode = #tpu.pipeline_mode<synchronous>, transform_indices = @transform_1, window_bounds = array<i64: 16, 1>}, {pipeline_mode = #tpu.pipeline_mode<synchronous>, transform_indices = @transform_2, window_bounds = array<i64: 16, 1>}, {pipeline_mode = #tpu.pipeline_mode<synchronous>, transform_indices = @transform_3, window_bounds = array<i64: 32, 16>}, {pipeline_mode = #tpu.pipeline_mode<synchronous>, transform_indices = @transform_4, window_bounds = array<i64: 32, 1>}, {pipeline_mode = #tpu.pipeline_mode<synchronous>, transform_indices = @transform_5, window_bounds = array<i64: 9, 8, 32>}, {pipeline_mode = #tpu.pipeline_mode<synchronous>, transform_indices = @transform_6, window_bounds = array<i64: 9, 256>}, {transform_indices = @transform_7, window_bounds = array<i64: 1, 24, 256>}]} {
    %c0 = arith.constant 0 : index
    %c0_0 = arith.constant 0 : index
    %0 = vector.load %arg2[%c0, %c0_0] : memref<16x1xf32, #tpu.memory_space<vmem>>, vector<16x1xf32>
    %c0_1 = arith.constant 0 : index
    %c0_2 = arith.constant 0 : index
    %1 = vector.load %arg3[%c0_1, %c0_2] : memref<16x1xf32, #tpu.memory_space<vmem>>, vector<16x1xf32>
    %c0_3 = arith.constant 0 : index
    %c0_4 = arith.constant 0 : index
    %2 = vector.load %arg5[%c0_3, %c0_4] : memref<32x1xf32, #tpu.memory_space<vmem>>, vector<32x1xf32>
    %c0_5 = arith.constant 0 : index
    %c0_6 = arith.constant 0 : index
    %c0_7 = arith.constant 0 : index
    %3 = vector.load %arg1[%c0_5, %c0_6, %c0_7] : memref<1x16x256xf32, #tpu.memory_space<vmem>>, vector<1x16x256xf32>
    %4 = vector.shape_cast %3 : vector<1x16x256xf32> to vector<16x256xf32>
    %c0_8 = arith.constant 0 : index
    %c0_9 = arith.constant 0 : index
    %c0_10 = arith.constant 0 : index
    %5 = vector.load %arg8[%c0_8, %c0_9, %c0_10] : memref<1x24x256xf32, #tpu.memory_space<vmem>>, vector<1x16x256xf32>
    %6 = vector.shape_cast %5 : vector<1x16x256xf32> to vector<16x256xf32>
    %7 = vector.shape_cast %4 : vector<16x256xf32> to vector<1x16x256xf32>
    tpu.vector_store %arg8[%c0_8, %c0_9, %c0_10], %7 {strides = array<i32>} : memref<1x24x256xf32, #tpu.memory_space<vmem>>, vector<1x16x256xf32>,
    %8 = vector.broadcast %0 : vector<16x1xf32> to vector<16x256xf32>
    %9 = arith.mulf %4, %8 : vector<16x256xf32>
    %10 = vector.broadcast %1 : vector<16x1xf32> to vector<16x256xf32>
    %11 = arith.addf %9, %10 : vector<16x256xf32>
    %cst = arith.constant 0.000000e+00 : f32
    %12 = vector.broadcast %cst : f32 to vector<16x256xf32>
    %13 = arith.maximumf %11, %12 : vector<16x256xf32>
    %c0_11 = arith.constant 0 : index
    %c0_12 = arith.constant 0 : index
    %14 = vector.load %arg4[%c0_11, %c0_12] : memref<32x16xbf16, #tpu.memory_space<vmem>>, vector<32x16xbf16>
    %15 = arith.truncf %13 : vector<16x256xf32> to vector<16x256xbf16>
    %cst_13 = arith.constant dense<0.000000e+00> : vector<32x256xf32>
    %16 = tpu.matmul %14, %15, %cst_13 {dimension_numbers = #tpu.dot_dimension_numbers<[1], [0], [0], [1], [0, 0, 1, 1], [], []>} : vector<32x16xbf16>, vector<16x256xbf16>, vector<32x256xf32> -> vector<32x256xf32>
    %17 = vector.broadcast %2 : vector<32x1xf32> to vector<32x256xf32>
    %18 = arith.addf %16, %17 : vector<32x256xf32>
    %cst_14 = arith.constant 0.000000e+00 : f32
    %19 = vector.broadcast %cst_14 : f32 to vector<32x256xf32>
    %20 = arith.maximumf %18, %19 : vector<32x256xf32>
    %c17_i32 = arith.constant 17 : i32
    %21 = tpu.dynamic_rotate %20 by %c17_i32 dim 1 : vector<32x256xf32>, i32 -> vector<32x256xf32>
    %c0_15 = arith.constant 0 : index
    %c0_16 = arith.constant 0 : index
    %22 = vector.load %arg7[%c0_15, %c0_16] : memref<9x256xf32, #tpu.memory_space<vmem>>, vector<1x256xf32>
    %23 = vector.broadcast %22 : vector<1x256xf32> to vector<32x256xf32>
    %24 = arith.mulf %21, %23 : vector<32x256xf32>
    %c0_17 = arith.constant 0 : index
    %c0_18 = arith.constant 0 : index
    %c0_19 = arith.constant 0 : index
    %25 = vector.load %arg6[%c0_17, %c0_18, %c0_19] : memref<9x8x32xbf16, #tpu.memory_space<vmem>>, vector<1x8x32xbf16>
    %26 = vector.shape_cast %25 : vector<1x8x32xbf16> to vector<8x32xbf16>
    %27 = arith.truncf %24 : vector<32x256xf32> to vector<32x256xbf16>
    %cst_20 = arith.constant dense<0.000000e+00> : vector<8x256xf32>
    %28 = tpu.matmul %26, %27, %cst_20 {dimension_numbers = #tpu.dot_dimension_numbers<[1], [0], [0], [1], [0, 0, 1, 1], [], []>} : vector<8x32xbf16>, vector<32x256xbf16>, vector<8x256xf32> -> vector<8x256xf32>
    %c16_i32 = arith.constant 16 : i32
    %29 = tpu.dynamic_rotate %20 by %c16_i32 dim 1 : vector<32x256xf32>, i32 -> vector<32x256xf32>
    %c1 = arith.constant 1 : index
    %c0_21 = arith.constant 0 : index
    %30 = vector.load %arg7[%c1, %c0_21] : memref<9x256xf32, #tpu.memory_space<vmem>>, vector<1x256xf32>
    %31 = vector.broadcast %30 : vector<1x256xf32> to vector<32x256xf32>
    %32 = arith.mulf %29, %31 : vector<32x256xf32>
    %c1_22 = arith.constant 1 : index
    %c0_23 = arith.constant 0 : index
    %c0_24 = arith.constant 0 : index
    %33 = vector.load %arg6[%c1_22, %c0_23, %c0_24] : memref<9x8x32xbf16, #tpu.memory_space<vmem>>, vector<1x8x32xbf16>
    %34 = vector.shape_cast %33 : vector<1x8x32xbf16> to vector<8x32xbf16>
    %35 = arith.truncf %32 : vector<32x256xf32> to vector<32x256xbf16>
    %cst_25 = arith.constant dense<0.000000e+00> : vector<8x256xf32>
    %36 = tpu.matmul %34, %35, %cst_25 {dimension_numbers = #tpu.dot_dimension_numbers<[1], [0], [0], [1], [0, 0, 1, 1], [], []>} : vector<8x32xbf16>, vector<32x256xbf16>, vector<8x256xf32> -> vector<8x256xf32>
    %37 = arith.addf %28, %36 : vector<8x256xf32>
    %c15_i32 = arith.constant 15 : i32
    %38 = tpu.dynamic_rotate %20 by %c15_i32 dim 1 : vector<32x256xf32>, i32 -> vector<32x256xf32>
    %c2 = arith.constant 2 : index
    %c0_26 = arith.constant 0 : index
    %39 = vector.load %arg7[%c2, %c0_26] : memref<9x256xf32, #tpu.memory_space<vmem>>, vector<1x256xf32>
    %40 = vector.broadcast %39 : vector<1x256xf32> to vector<32x256xf32>
    %41 = arith.mulf %38, %40 : vector<32x256xf32>
    %c2_27 = arith.constant 2 : index
    %c0_28 = arith.constant 0 : index
    %c0_29 = arith.constant 0 : index
    %42 = vector.load %arg6[%c2_27, %c0_28, %c0_29] : memref<9x8x32xbf16, #tpu.memory_space<vmem>>, vector<1x8x32xbf16>
    %43 = vector.shape_cast %42 : vector<1x8x32xbf16> to vector<8x32xbf16>
    %44 = arith.truncf %41 : vector<32x256xf32> to vector<32x256xbf16>
    %cst_30 = arith.constant dense<0.000000e+00> : vector<8x256xf32>
    %45 = tpu.matmul %43, %44, %cst_30 {dimension_numbers = #tpu.dot_dimension_numbers<[1], [0], [0], [1], [0, 0, 1, 1], [], []>} : vector<8x32xbf16>, vector<32x256xbf16>, vector<8x256xf32> -> vector<8x256xf32>
    %46 = arith.addf %37, %45 : vector<8x256xf32>
    %c1_i32 = arith.constant 1 : i32
    %47 = tpu.dynamic_rotate %20 by %c1_i32 dim 1 : vector<32x256xf32>, i32 -> vector<32x256xf32>
    %c3 = arith.constant 3 : index
    %c0_31 = arith.constant 0 : index
    %48 = vector.load %arg7[%c3, %c0_31] : memref<9x256xf32, #tpu.memory_space<vmem>>, vector<1x256xf32>
    %49 = vector.broadcast %48 : vector<1x256xf32> to vector<32x256xf32>
    %50 = arith.mulf %47, %49 : vector<32x256xf32>
    %c3_32 = arith.constant 3 : index
    %c0_33 = arith.constant 0 : index
    %c0_34 = arith.constant 0 : index
    %51 = vector.load %arg6[%c3_32, %c0_33, %c0_34] : memref<9x8x32xbf16, #tpu.memory_space<vmem>>, vector<1x8x32xbf16>
    %52 = vector.shape_cast %51 : vector<1x8x32xbf16> to vector<8x32xbf16>
    %53 = arith.truncf %50 : vector<32x256xf32> to vector<32x256xbf16>
    %cst_35 = arith.constant dense<0.000000e+00> : vector<8x256xf32>
    %54 = tpu.matmul %52, %53, %cst_35 {dimension_numbers = #tpu.dot_dimension_numbers<[1], [0], [0], [1], [0, 0, 1, 1], [], []>} : vector<8x32xbf16>, vector<32x256xbf16>, vector<8x256xf32> -> vector<8x256xf32>
    %55 = arith.addf %46, %54 : vector<8x256xf32>
    %c4 = arith.constant 4 : index
    %c0_36 = arith.constant 0 : index
    %c0_37 = arith.constant 0 : index
    %56 = vector.load %arg6[%c4, %c0_36, %c0_37] : memref<9x8x32xbf16, #tpu.memory_space<vmem>>, vector<1x8x32xbf16>
    %57 = vector.shape_cast %56 : vector<1x8x32xbf16> to vector<8x32xbf16>
    %58 = arith.truncf %20 : vector<32x256xf32> to vector<32x256xbf16>
    %cst_38 = arith.constant dense<0.000000e+00> : vector<8x256xf32>
    %59 = tpu.matmul %57, %58, %cst_38 {dimension_numbers = #tpu.dot_dimension_numbers<[1], [0], [0], [1], [0, 0, 1, 1], [], []>} : vector<8x32xbf16>, vector<32x256xbf16>, vector<8x256xf32> -> vector<8x256xf32>
    %60 = arith.addf %55, %59 : vector<8x256xf32>
    %c255_i32 = arith.constant 255 : i32
    %61 = tpu.dynamic_rotate %20 by %c255_i32 dim 1 : vector<32x256xf32>, i32 -> vector<32x256xf32>
    %c5 = arith.constant 5 : index
    %c0_39 = arith.constant 0 : index
    %62 = vector.load %arg7[%c5, %c0_39] : memref<9x256xf32, #tpu.memory_space<vmem>>, vector<1x256xf32>
    %63 = vector.broadcast %62 : vector<1x256xf32> to vector<32x256xf32>
    %64 = arith.mulf %61, %63 : vector<32x256xf32>
    %c5_40 = arith.constant 5 : index
    %c0_41 = arith.constant 0 : index
    %c0_42 = arith.constant 0 : index
    %65 = vector.load %arg6[%c5_40, %c0_41, %c0_42] : memref<9x8x32xbf16, #tpu.memory_space<vmem>>, vector<1x8x32xbf16>
    %66 = vector.shape_cast %65 : vector<1x8x32xbf16> to vector<8x32xbf16>
    %67 = arith.truncf %64 : vector<32x256xf32> to vector<32x256xbf16>
    %cst_43 = arith.constant dense<0.000000e+00> : vector<8x256xf32>
    %68 = tpu.matmul %66, %67, %cst_43 {dimension_numbers = #tpu.dot_dimension_numbers<[1], [0], [0], [1], [0, 0, 1, 1], [], []>} : vector<8x32xbf16>, vector<32x256xbf16>, vector<8x256xf32> -> vector<8x256xf32>
    %69 = arith.addf %60, %68 : vector<8x256xf32>
    %c241_i32 = arith.constant 241 : i32
    %70 = tpu.dynamic_rotate %20 by %c241_i32 dim 1 : vector<32x256xf32>, i32 -> vector<32x256xf32>
    %c6 = arith.constant 6 : index
    %c0_44 = arith.constant 0 : index
    %71 = vector.load %arg7[%c6, %c0_44] : memref<9x256xf32, #tpu.memory_space<vmem>>, vector<1x256xf32>
    %72 = vector.broadcast %71 : vector<1x256xf32> to vector<32x256xf32>
    %73 = arith.mulf %70, %72 : vector<32x256xf32>
    %c6_45 = arith.constant 6 : index
    %c0_46 = arith.constant 0 : index
    %c0_47 = arith.constant 0 : index
    %74 = vector.load %arg6[%c6_45, %c0_46, %c0_47] : memref<9x8x32xbf16, #tpu.memory_space<vmem>>, vector<1x8x32xbf16>
    %75 = vector.shape_cast %74 : vector<1x8x32xbf16> to vector<8x32xbf16>
    %76 = arith.truncf %73 : vector<32x256xf32> to vector<32x256xbf16>
    %cst_48 = arith.constant dense<0.000000e+00> : vector<8x256xf32>
    %77 = tpu.matmul %75, %76, %cst_48 {dimension_numbers = #tpu.dot_dimension_numbers<[1], [0], [0], [1], [0, 0, 1, 1], [], []>} : vector<8x32xbf16>, vector<32x256xbf16>, vector<8x256xf32> -> vector<8x256xf32>
    %78 = arith.addf %69, %77 : vector<8x256xf32>
    %c240_i32 = arith.constant 240 : i32
    %79 = tpu.dynamic_rotate %20 by %c240_i32 dim 1 : vector<32x256xf32>, i32 -> vector<32x256xf32>
    %c7 = arith.constant 7 : index
    %c0_49 = arith.constant 0 : index
    %80 = vector.load %arg7[%c7, %c0_49] : memref<9x256xf32, #tpu.memory_space<vmem>>, vector<1x256xf32>
    %81 = vector.broadcast %80 : vector<1x256xf32> to vector<32x256xf32>
    %82 = arith.mulf %79, %81 : vector<32x256xf32>
    %c7_50 = arith.constant 7 : index
    %c0_51 = arith.constant 0 : index
    %c0_52 = arith.constant 0 : index
    %83 = vector.load %arg6[%c7_50, %c0_51, %c0_52] : memref<9x8x32xbf16, #tpu.memory_space<vmem>>, vector<1x8x32xbf16>
    %84 = vector.shape_cast %83 : vector<1x8x32xbf16> to vector<8x32xbf16>
    %85 = arith.truncf %82 : vector<32x256xf32> to vector<32x256xbf16>
    %cst_53 = arith.constant dense<0.000000e+00> : vector<8x256xf32>
    %86 = tpu.matmul %84, %85, %cst_53 {dimension_numbers = #tpu.dot_dimension_numbers<[1], [0], [0], [1], [0, 0, 1, 1], [], []>} : vector<8x32xbf16>, vector<32x256xbf16>, vector<8x256xf32> -> vector<8x256xf32>
    %87 = arith.addf %78, %86 : vector<8x256xf32>
    %c239_i32 = arith.constant 239 : i32
    %88 = tpu.dynamic_rotate %20 by %c239_i32 dim 1 : vector<32x256xf32>, i32 -> vector<32x256xf32>
    %c8 = arith.constant 8 : index
    %c0_54 = arith.constant 0 : index
    %89 = vector.load %arg7[%c8, %c0_54] : memref<9x256xf32, #tpu.memory_space<vmem>>, vector<1x256xf32>
    %90 = vector.broadcast %89 : vector<1x256xf32> to vector<32x256xf32>
    %91 = arith.mulf %88, %90 : vector<32x256xf32>
    %c8_55 = arith.constant 8 : index
    %c0_56 = arith.constant 0 : index
    %c0_57 = arith.constant 0 : index
    %92 = vector.load %arg6[%c8_55, %c0_56, %c0_57] : memref<9x8x32xbf16, #tpu.memory_space<vmem>>, vector<1x8x32xbf16>
    %93 = vector.shape_cast %92 : vector<1x8x32xbf16> to vector<8x32xbf16>
    %94 = arith.truncf %91 : vector<32x256xf32> to vector<32x256xbf16>
    %cst_58 = arith.constant dense<0.000000e+00> : vector<8x256xf32>
    %95 = tpu.matmul %93, %94, %cst_58 {dimension_numbers = #tpu.dot_dimension_numbers<[1], [0], [0], [1], [0, 0, 1, 1], [], []>} : vector<8x32xbf16>, vector<32x256xbf16>, vector<8x256xf32> -> vector<8x256xf32>
    %96 = arith.addf %87, %95 : vector<8x256xf32>
    %c0_59 = arith.constant 0 : index
    %c16 = arith.constant 16 : index
    %c0_60 = arith.constant 0 : index
    %97 = vector.load %arg8[%c0_59, %c16, %c0_60] : memref<1x24x256xf32, #tpu.memory_space<vmem>>, vector<1x8x256xf32>
    %98 = vector.shape_cast %97 : vector<1x8x256xf32> to vector<8x256xf32>
    %99 = vector.shape_cast %96 : vector<8x256xf32> to vector<1x8x256xf32>
    tpu.vector_store %arg8[%c0_59, %c16, %c0_60], %99 {strides = array<i32>} : memref<1x24x256xf32, #tpu.memory_space<vmem>>, vector<1x8x256xf32>,
    return
  }
  func.func @transform_0(%arg0: i32) -> (i32, i32, i32) {
    %c0_i32 = arith.constant 0 : i32
    %c0_i32_0 = arith.constant 0 : i32
    %c0_i32_1 = arith.constant 0 : i32
    return %arg0, %c0_i32, %c0_i32_0 : i32, i32, i32
  }
  func.func @transform_1(%arg0: i32) -> (i32, i32) {
    %c0_i32 = arith.constant 0 : i32
    %c0_i32_0 = arith.constant 0 : i32
    %c0_i32_1 = arith.constant 0 : i32
    return %c0_i32, %c0_i32_0 : i32, i32
  }
  func.func @transform_2(%arg0: i32) -> (i32, i32) {
    %c0_i32 = arith.constant 0 : i32
    %c0_i32_0 = arith.constant 0 : i32
    %c0_i32_1 = arith.constant 0 : i32
    return %c0_i32, %c0_i32_0 : i32, i32
  }
  func.func @transform_3(%arg0: i32) -> (i32, i32) {
    %c0_i32 = arith.constant 0 : i32
    %c0_i32_0 = arith.constant 0 : i32
    %c0_i32_1 = arith.constant 0 : i32
    return %c0_i32, %c0_i32_0 : i32, i32
  }
  func.func @transform_4(%arg0: i32) -> (i32, i32) {
    %c0_i32 = arith.constant 0 : i32
    %c0_i32_0 = arith.constant 0 : i32
    %c0_i32_1 = arith.constant 0 : i32
    return %c0_i32, %c0_i32_0 : i32, i32
  }
  func.func @transform_5(%arg0: i32) -> (i32, i32, i32) {
    %c0_i32 = arith.constant 0 : i32
    %c0_i32_0 = arith.constant 0 : i32
    %c0_i32_1 = arith.constant 0 : i32
    %c0_i32_2 = arith.constant 0 : i32
    return %c0_i32, %c0_i32_0, %c0_i32_1 : i32, i32, i32
  }
  func.func @transform_6(%arg0: i32) -> (i32, i32) {
    %c0_i32 = arith.constant 0 : i32
    %c0_i32_0 = arith.constant 0 : i32
    %c0_i32_1 = arith.constant 0 : i32
    return %c0_i32, %c0_i32_0 : i32, i32
  }
  func.func @transform_7(%arg0: i32) -> (i32, i32, i32) {
    %c0_i32 = arith.constant 0 : i32
    %c0_i32_0 = arith.constant 0 : i32
    %c0_i32_1 = arith.constant 0 : i32
    return %arg0, %c0_i32, %c0_i32_0 : i32, i32, i32
  }
}

</mosaic_0001>

<llo_original>
// kernel: bottleneck_forward.1
$region0: #{bottleneck_forward.1}
  #allocation0 [shape = 'u32[]', space=smem, size = 0x4, offset = 0x4, fixed_abs, tag = 'smem constant byte address 0x4 - core index']
  #allocation1 [shape = 'u32[72,128]{1,0:T(1,128)}', space=vmem, size = 0x9000, scoped, tag = 'internal scratch']
  %s0 = inlined_call_operand.vmem [shape: f32[2,16,256], index: 0, kind: input, shape index: {}]
  %s1 = inlined_call_operand.vmem [shape: f32[16,1], index: 1, kind: input, shape index: {}]
  %s2 = inlined_call_operand.vmem [shape: f32[16,1], index: 2, kind: input, shape index: {}]
  %s3 = inlined_call_operand.vmem [shape: bf16[32,16], index: 3, kind: input, shape index: {}]
  %s4 = inlined_call_operand.vmem [shape: f32[32,1], index: 4, kind: input, shape index: {}]
  %s5 = inlined_call_operand.vmem [shape: bf16[9,8,32], index: 5, kind: input, shape index: {}]
  %s6 = inlined_call_operand.vmem [shape: f32[9,256], index: 6, kind: input, shape index: {}]
  %s7 = inlined_call_operand.vmem [shape: f32[2,24,256], index: 7, kind: output, shape index: {}]
  %s8 = sld [smem:[#allocation0]]
  $region61: #{bottleneck_forward.1} parent=0
    _
  %s10 = ssub.s32 1, %s8
  %s11 = scalar_select 0, %s10, %s8
  loop: start=0, step=1, limit=4
  $region2: #{bottleneck_forward.1} parent=0 // loop_pre_header
    _
  $region3: #{bottleneck_forward.1} parent=0 // loop_header
    %s13 = sphi 0, %s17
    %p14 = scmp.ge.s32.totalorder %s13, 4
    %s23 = sphi 0, %s25
    %s26 = sphi 0, %s23
    %s27 = sphi 0, %s26
    %s43 = sphi 0, %s27
    %s47 = sphi 0, %s47
    %s49 = sphi 0, %s47
    %s50 = sphi 0, %s49
    %s64 = sphi 0, %s50
    %s68 = sphi 0, %s68
    %s70 = sphi 0, %s68
    %s71 = sphi 0, %s70
    %s85 = sphi 0, %s71
    %s89 = sphi 0, %s89
    %s91 = sphi 0, %s89
    %s92 = sphi 0, %s91
    %s106 = sphi 0, %s92
    %s110 = sphi 0, %s110
    %s112 = sphi 0, %s110
    %s113 = sphi 0, %s112
    %s127 = sphi 0, %s113
    %s131 = sphi 0, %s131
    %s133 = sphi 0, %s131
    %s134 = sphi 0, %s133
    %s148 = sphi 0, %s134
    %s152 = sphi 0, %s152
    %s154 = sphi 0, %s152
    %s155 = sphi 0, %s154
    %s169 = sphi 0, %s155
    %s175 = sphi 0, %s177
    %s178 = sphi 0, %s175
    %s179 = sphi 0, %s178
    %s195 = sphi 0, %s179
  $region4: #{bottleneck_forward.1} parent=0 // loop_header_branch
    %16 = sbr.rel (%p14) target = $region8
  $region5: #{bottleneck_forward.1} parent=0 // loop_body
    %s18 = ssub.s32 %s13, 1
    %s19 = ssub.s32 %s13, 2
    %s20 = sadd.s32 %s13, 1
    %s21 = ssub.s32 %s13, %s20
    %p22 = scmp.eq.s32.totalorder %s21, 0
    %s24 = sadd.s32 %s23, 1
    %s25 = scalar_select %p22, %s23, %s24
    %p28 = pneg %p22
    %p29 = scmp.eq.s32.totalorder %s13, 1
    %p30 = por %p28, %p29
    %p31 = scmp.ne.s32.totalorder %s23, %s26
    %p32 = scmp.eq.s32.totalorder %s13, 0
    %p33 = por %p31, %p32
    %p34 = scmp.ne.s32.totalorder %s23, %s26
    %p35 = scmp.eq.s32.totalorder %s18, 1
    %p36 = por %p34, %p35
    %p37 = scmp.ne.s32.totalorder %s26, %s27
    %p38 = scmp.eq.s32.totalorder %s18, 0
    %p39 = por %p37, %p38
    %p40 = scmp.ne.s32.totalorder %s26, %s27
    %p41 = scmp.eq.s32.totalorder %s19, 1
    %p42 = por %p40, %p41
    %p44 = scmp.ne.s32.totalorder %s27, %s43
    %p45 = scmp.eq.s32.totalorder %s19, 0
    %p46 = por %p44, %p45
    %s48 = sadd.s32 %s47, 1
    %p51 = scmp.eq.s32.totalorder %s13, 1
    %p52 = scmp.ne.s32.totalorder %s47, %s49
    %p53 = scmp.eq.s32.totalorder %s13, 0
    %p54 = por %p52, %p53
    %p55 = scmp.ne.s32.totalorder %s47, %s49
    %p56 = scmp.eq.s32.totalorder %s18, 1
    %p57 = por %p55, %p56
    %p58 = scmp.ne.s32.totalorder %s49, %s50
    %p59 = scmp.eq.s32.totalorder %s18, 0
    %p60 = por %p58, %p59
    %p61 = scmp.ne.s32.totalorder %s49, %s50
    %p62 = scmp.eq.s32.totalorder %s19, 1
    %p63 = por %p61, %p62
    %p65 = scmp.ne.s32.totalorder %s50, %s64
    %p66 = scmp.eq.s32.totalorder %s19, 0
    %p67 = por %p65, %p66
    %s69 = sadd.s32 %s68, 1
    %p72 = scmp.eq.s32.totalorder %s13, 1
    %p73 = scmp.ne.s32.totalorder %s68, %s70
    %p74 = scmp.eq.s32.totalorder %s13, 0
    %p75 = por %p73, %p74
    %p76 = scmp.ne.s32.totalorder %s68, %s70
    %p77 = scmp.eq.s32.totalorder %s18, 1
    %p78 = por %p76, %p77
    %p79 = scmp.ne.s32.totalorder %s70, %s71
    %p80 = scmp.eq.s32.totalorder %s18, 0
    %p81 = por %p79, %p80
    %p82 = scmp.ne.s32.totalorder %s70, %s71
    %p83 = scmp.eq.s32.totalorder %s19, 1
    %p84 = por %p82, %p83
    %p86 = scmp.ne.s32.totalorder %s71, %s85
    %p87 = scmp.eq.s32.totalorder %s19, 0
    %p88 = por %p86, %p87
    %s90 = sadd.s32 %s89, 1
    %p93 = scmp.eq.s32.totalorder %s13, 1
    %p94 = scmp.ne.s32.totalorder %s89, %s91
    %p95 = scmp.eq.s32.totalorder %s13, 0
    %p96 = por %p94, %p95
    %p97 = scmp.ne.s32.totalorder %s89, %s91
    %p98 = scmp.eq.s32.totalorder %s18, 1
    %p99 = por %p97, %p98
    %p100 = scmp.ne.s32.totalorder %s91, %s92
    %p101 = scmp.eq.s32.totalorder %s18, 0
    %p102 = por %p100, %p101
    %p103 = scmp.ne.s32.totalorder %s91, %s92
    %p104 = scmp.eq.s32.totalorder %s19, 1
    %p105 = por %p103, %p104
    %p107 = scmp.ne.s32.totalorder %s92, %s106
    %p108 = scmp.eq.s32.totalorder %s19, 0
    %p109 = por %p107, %p108
    %s111 = sadd.s32 %s110, 1
    %p114 = scmp.eq.s32.totalorder %s13, 1
    %p115 = scmp.ne.s32.totalorder %s110, %s112
    %p116 = scmp.eq.s32.totalorder %s13, 0
    %p117 = por %p115, %p116
    %p118 = scmp.ne.s32.totalorder %s110, %s112
    %p119 = scmp.eq.s32.totalorder %s18, 1
    %p120 = por %p118, %p119
    %p121 = scmp.ne.s32.totalorder %s112, %s113
    %p122 = scmp.eq.s32.totalorder %s18, 0
    %p123 = por %p121, %p122
    %p124 = scmp.ne.s32.totalorder %s112, %s113
    %p125 = scmp.eq.s32.totalorder %s19, 1
    %p126 = por %p124, %p125
    %p128 = scmp.ne.s32.totalorder %s113, %s127
    %p129 = scmp.eq.s32.totalorder %s19, 0
    %p130 = por %p128, %p129
    %s132 = sadd.s32 %s131, 1
    %p135 = scmp.eq.s32.totalorder %s13, 1
    %p136 = scmp.ne.s32.totalorder %s131, %s133
    %p137 = scmp.eq.s32.totalorder %s13, 0
    %p138 = por %p136, %p137
    %p139 = scmp.ne.s32.totalorder %s131, %s133
    %p140 = scmp.eq.s32.totalorder %s18, 1
    %p141 = por %p139, %p140
    %p142 = scmp.ne.s32.totalorder %s133, %s134
    %p143 = scmp.eq.s32.totalorder %s18, 0
    %p144 = por %p142, %p143
    %p145 = scmp.ne.s32.totalorder %s133, %s134
    %p146 = scmp.eq.s32.totalorder %s19, 1
    %p147 = por %p145, %p146
    %p149 = scmp.ne.s32.totalorder %s134, %s148
    %p150 = scmp.eq.s32.totalorder %s19, 0
    %p151 = por %p149, %p150
    %s153 = sadd.s32 %s152, 1
    %p156 = scmp.eq.s32.totalorder %s13, 1
    %p157 = scmp.ne.s32.totalorder %s152, %s154
    %p158 = scmp.eq.s32.totalorder %s13, 0
    %p159 = por %p157, %p158
    %p160 = scmp.ne.s32.totalorder %s152, %s154
    %p161 = scmp.eq.s32.totalorder %s18, 1
    %p162 = por %p160, %p161
    %p163 = scmp.ne.s32.totalorder %s154, %s155
    %p164 = scmp.eq.s32.totalorder %s18, 0
    %p165 = por %p163, %p164
    %p166 = scmp.ne.s32.totalorder %s154, %s155
    %p167 = scmp.eq.s32.totalorder %s19, 1
    %p168 = por %p166, %p167
    %p170 = scmp.ne.s32.totalorder %s155, %s169
    %p171 = scmp.eq.s32.totalorder %s19, 0
    %p172 = por %p170, %p171
    %s173 = ssub.s32 %s13, %s20
    %p174 = scmp.eq.s32.totalorder %s173, 0
    %s176 = sadd.s32 %s175, 1
    %s177 = scalar_select %p174, %s175, %s176
    %p180 = pneg %p174
    %p181 = scmp.eq.s32.totalorder %s13, 1
    %p182 = por %p180, %p181
    %p183 = scmp.ne.s32.totalorder %s175, %s178
    %p184 = scmp.eq.s32.totalorder %s13, 0
    %p185 = por %p183, %p184
    %p186 = scmp.ne.s32.totalorder %s175, %s178
    %p187 = scmp.eq.s32.totalorder %s18, 1
    %p188 = por %p186, %p187
    %p189 = scmp.ne.s32.totalorder %s178, %s179
    %p190 = scmp.eq.s32.totalorder %s18, 0
    %p191 = por %p189, %p190
    %p192 = scmp.ne.s32.totalorder %s178, %s179
    %p193 = scmp.eq.s32.totalorder %s19, 1
    %p194 = por %p192, %p193
    %p196 = scmp.ne.s32.totalorder %s179, %s195
    %p197 = scmp.eq.s32.totalorder %s19, 0
    %p198 = por %p196, %p197
    %p199 = scmp.le.s32.totalorder 1, %s13
    %p200 = scmp.lt.s32.totalorder %s13, 3
    %p201 = pnand %p199, %p200
    %p202 = pneg %p201
    // Predicated region
    $region9: #{bottleneck_forward.1} parent=5 // pred_check
      _
    $region10: #{bottleneck_forward.1} parent=5 // pred_check_branch
      %204 = sbr.rel (%p201) target = $region12
    $region11: #{bottleneck_forward.1} parent=5 // pred_region
      %s205 = ssub.s32 %s13, 1
      // Predicated region
      $region13: #{bottleneck_forward.1} parent=11 // pred_check
        %p206 = pneg %p60
      $region14: #{bottleneck_forward.1} parent=11 // pred_check_branch
        %208 = sbr.rel (%p206) target = $region16
      $region15: #{bottleneck_forward.1} parent=11 // pred_region
        _
      $region16: #{bottleneck_forward.1} parent=11 // pred_fallthru
        _
      // Predicated region
      $region17: #{bottleneck_forward.1} parent=11 // pred_check
        %p209 = pneg %p81
      $region18: #{bottleneck_forward.1} parent=11 // pred_check_branch
        %211 = sbr.rel (%p209) target = $region20
      $region19: #{bottleneck_forward.1} parent=11 // pred_region
        _
      $region20: #{bottleneck_forward.1} parent=11 // pred_fallthru
        _
      // Predicated region
      $region21: #{bottleneck_forward.1} parent=11 // pred_check
        %p212 = pneg %p102
      $region22: #{bottleneck_forward.1} parent=11 // pred_check_branch
        %214 = sbr.rel (%p212) target = $region24
      $region23: #{bottleneck_forward.1} parent=11 // pred_region
        _
      $region24: #{bottleneck_forward.1} parent=11 // pred_fallthru
        _
      // Predicated region
      $region25: #{bottleneck_forward.1} parent=11 // pred_check
        %p215 = pneg %p123
      $region26: #{bottleneck_forward.1} parent=11 // pred_check_branch
        %217 = sbr.rel (%p215) target = $region28
      $region27: #{bottleneck_forward.1} parent=11 // pred_region
        _
      $region28: #{bottleneck_forward.1} parent=11 // pred_fallthru
        _
      // Predicated region
      $region29: #{bottleneck_forward.1} parent=11 // pred_check
        %p218 = pneg %p144
      $region30: #{bottleneck_forward.1} parent=11 // pred_check_branch
        %220 = sbr.rel (%p218) target = $region32
      $region31: #{bottleneck_forward.1} parent=11 // pred_region
        _
      $region32: #{bottleneck_forward.1} parent=11 // pred_fallthru
        _
      // Predicated region
      $region33: #{bottleneck_forward.1} parent=11 // pred_check
        %p221 = pneg %p165
      $region34: #{bottleneck_forward.1} parent=11 // pred_check_branch
        %223 = sbr.rel (%p221) target = $region36
      $region35: #{bottleneck_forward.1} parent=11 // pred_region
        _
      $region36: #{bottleneck_forward.1} parent=11 // pred_fallthru
        _
    $region12: #{bottleneck_forward.1} parent=5 // pred_fallthru
      _
    %p224 = scmp.lt.s32.totalorder %s13, 2
    // Predicated region
    $region37: #{bottleneck_forward.1} parent=5 // pred_check
      %p225 = pneg %p224
    $region38: #{bottleneck_forward.1} parent=5 // pred_check_branch
      %227 = sbr.rel (%p225) target = $region40
    $region39: #{bottleneck_forward.1} parent=5 // pred_region
      // Predicated region
      $region41: #{bottleneck_forward.1} parent=39 // pred_check
        %p228 = pneg %p33
      $region42: #{bottleneck_forward.1} parent=39 // pred_check_branch
        %230 = sbr.rel (%p228) target = $region44
      $region43: #{bottleneck_forward.1} parent=39 // pred_region
        %p231 = scmp.lt.s32.totalorder %s13, 1
        %s232 = scalar_select %p231, %s13, 1
        %s233 = smul.addr %s232, 4
        %s234 = smul.addr %s233, 8
        %s235 = scalar_lea.vmem %s0, %s234
      $region44: #{bottleneck_forward.1} parent=39 // pred_fallthru
        _
    $region40: #{bottleneck_forward.1} parent=5 // pred_fallthru
      _
    %p236 = scmp.le.s32.totalorder 1, %s13
    %p237 = scmp.lt.s32.totalorder %s13, 3
    %p238 = pnand %p236, %p237
    %p239 = pneg %p238
    // Predicated region
    $region45: #{bottleneck_forward.1} parent=5 // pred_check
      _
    $region46: #{bottleneck_forward.1} parent=5 // pred_check_branch
      %241 = sbr.rel (%p238) target = $region48
    $region47: #{bottleneck_forward.1} parent=5 // pred_region
      %s242 = ssub.s32 %s13, 1
      %p243 = scmp.lt.s32.totalorder %s18, 1
      %s244 = scalar_select %p243, %s18, 1
      %s245 = smul.addr %s244, 4
      %s246 = smul.addr %s245, 8
      %s247 = scalar_lea.vmem %s0, %s246
      %p248 = pneg %p39
      %p249 = pneg %p36
      %p250 = pneg %p60
      %p251 = pneg %p57
      %p252 = pneg %p81
      %p253 = pneg %p78
      %p254 = pneg %p102
      %p255 = pneg %p99
      %p256 = pneg %p123
      %p257 = pneg %p120
      %p258 = pneg %p144
      %p259 = pneg %p141
      %p260 = pneg %p165
      %p261 = pneg %p162
      %p262 = pneg %p191
      %p263 = pneg %p188
      %p264 = scmp.lt.s32.totalorder %s18, 1
      %s265 = scalar_select %p264, %s18, 1
      %s266 = smul.addr %s265, 6
      %s267 = smul.addr %s266, 8
      %s268 = scalar_lea.vmem %s7, %s267
      %p269 = scmp.lt.s32.totalorder %s18, 1
      %s270 = scalar_select %p269, %s18, 1
      %s271 = smul.addr %s270, 4
      %s272 = smul.addr %s271, 8
      %s273 = scalar_lea.vmem %s0, %s272
      %p274 = scmp.lt.s32.totalorder %s18, 1
      %s275 = scalar_select %p274, %s18, 1
      %s276 = smul.addr %s275, 6
      %s277 = smul.addr %s276, 8
      %s278 = scalar_lea.vmem %s7, %s277
      %v280 = vld [vmem:[%s1] sm:$0xff]
      %v281 = vld [vmem:[%s1 + $0x8] sm:$0xff]
      %v282 = vld [vmem:[%s2] sm:$0xff]
      %v283 = vld [vmem:[%s2 + $0x8] sm:$0xff]
      %v284 = vld [vmem:[%s4] sm:$0xff]
      %v285 = vld [vmem:[%s4 + $0x8] sm:$0xff]
      %v286 = vld [vmem:[%s4 + $0x10] sm:$0xff]
      %v287 = vld [vmem:[%s4 + $0x18] sm:$0xff]
      %v288 = vld [vmem:[%s273] sm:$0xff]
      %v289 = vld [vmem:[%s273 + $0x8] sm:$0xff]
      %v290 = vld [vmem:[%s273 + $0x10] sm:$0xff]
      %v291 = vld [vmem:[%s273 + $0x18] sm:$0xff]
      %292 = vst [vmem:[%s278] sm:$0xff] %v288
      %293 = vst [vmem:[%s278 + $0x8] sm:$0xff] %v289
      %294 = vst [vmem:[%s278 + $0x10] sm:$0xff] %v290
      %295 = vst [vmem:[%s278 + $0x18] sm:$0xff] %v291
      %297 = vset.pattern.permute.xlu0 0
      %298 = vperm.xlu0 %297, %v280
      %v299 = vpop.permute.xlu0 %298
      %302 = vset.pattern.permute.xlu0 0
      %303 = vperm.xlu0 %302, %v281
      %v304 = vpop.permute.xlu0 %303
      %v306 = vmul.f32 %v288, %v299
      %v307 = vmul.f32 %v289, %v299
      %v308 = vmul.f32 %v290, %v304
      %v309 = vmul.f32 %v291, %v304
      %311 = vset.pattern.permute.xlu0 0
      %312 = vperm.xlu0 %311, %v282
      %v313 = vpop.permute.xlu0 %312
      %316 = vset.pattern.permute.xlu0 0
      %317 = vperm.xlu0 %316, %v283
      %v318 = vpop.permute.xlu0 %317
      %v320 = vadd.f32 %v306, %v313
      %v321 = vadd.f32 %v307, %v313
      %v322 = vadd.f32 %v308, %v318
      %v323 = vadd.f32 %v309, %v318
      %v324 = vmax.f32 %v320, 0.0
      %v325 = vmax.f32 %v321, 0.0
      %v326 = vmax.f32 %v322, 0.0
      %v327 = vmax.f32 %v323, 0.0
      %v328 = vld [vmem:[%s3] sm:$0xf]
      %v329 = vld [vmem:[%s3 + $0x4] sm:$0xf]
      %v330 = vld [vmem:[%s3 + $0x8] sm:$0xf]
      %v331 = vld [vmem:[%s3 + $0xc] sm:$0xf]
      %v332 = vpack.c.bf16 %v326, %v324
      %v333 = vpack.c.bf16 %v327, %v325
      %335 = vset.pattern.permute.xlu0 0
      %336 = vperm.xlu0 %335, %v284
      %v337 = vpop.permute.xlu0 %336
      %340 = vset.pattern.permute.xlu0 0
      %341 = vperm.xlu0 %340, %v285
      %v342 = vpop.permute.xlu0 %341
      %345 = vset.pattern.permute.xlu0 0
      %346 = vperm.xlu0 %345, %v286
      %v347 = vpop.permute.xlu0 %346
      %350 = vset.pattern.permute.xlu0 0
      %351 = vperm.xlu0 %350, %v287
      %v352 = vpop.permute.xlu0 %351
      %v358 = vunpack.c.l.b16 %v328
      %v359 = vunpack.c.l.b16 %v329
      %v360 = vunpack.c.l.b16 %v330
      %v361 = vunpack.c.l.b16 %v331
      %v362 = vpack.c.b16 %v359, %v358
      %v363 = vpack.c.b16 %v361, %v360
      %vm364 = vcmask 130048
      %v366 = vsel %vm364, %v362, 0
      %v369 = vsel %vm364, %v363, 0
      %371 = vmatpush.bf16.msra.mxu0 0
      %372 = vmatpush.bf16.msra.mxu0 0
      %373 = vmatpush.bf16.msra.mxu0 0
      %374 = vmatpush.bf16.msra.mxu0 0
      %375 = vmatpush.bf16.msra.mxu0 0
      %376 = vmatpush.bf16.msra.mxu0 0
      %377 = vmatpush.bf16.msra.mxu0 0
      %378 = vmatpush.bf16.msra.mxu0 %v332
      %379 = vmatmul.bf16.gmra.mxu0 %v366
      %v380 = vpop.f32.mrf.mxu0
      %v381 = vadd.f32 %v337, %v380
      %v382 = vpop.f32.mrf.mxu0
      %v383 = vadd.f32 %v342, %v382
      %384 = vmatmul.bf16.gmra.mxu0 %v369
      %v385 = vpop.f32.mrf.mxu0
      %v386 = vadd.f32 %v347, %v385
      %v387 = vpop.f32.mrf.mxu0
      %v388 = vadd.f32 %v352, %v387
      %389 = vdwg.mxu0
      %390 = vmatpush.bf16.msra.mxu0 0
      %391 = vmatpush.bf16.msra.mxu0 0
      %392 = vmatpush.bf16.msra.mxu0 0
      %393 = vmatpush.bf16.msra.mxu0 0
      %394 = vmatpush.bf16.msra.mxu0 0
      %395 = vmatpush.bf16.msra.mxu0 0
      %396 = vmatpush.bf16.msra.mxu0 0
      %397 = vmatpush.bf16.msra.mxu0 %v333
      %398 = vmatmul.bf16.gmra.mxu0 %v366
      %v399 = vpop.f32.mrf.mxu0
      %v400 = vadd.f32 %v337, %v399
      %v401 = vpop.f32.mrf.mxu0
      %v402 = vadd.f32 %v342, %v401
      %403 = vmatmul.bf16.gmra.mxu0 %v369
      %v404 = vpop.f32.mrf.mxu0
      %v405 = vadd.f32 %v347, %v404
      %v406 = vpop.f32.mrf.mxu0
      %v407 = vadd.f32 %v352, %v406
      %408 = vdwg.mxu0
      %v409 = vmax.f32 %v381, 0.0
      %v410 = vmax.f32 %v400, 0.0
      %v411 = vmax.f32 %v383, 0.0
      %v412 = vmax.f32 %v402, 0.0
      %v413 = vmax.f32 %v386, 0.0
      %v414 = vmax.f32 %v405, 0.0
      %v415 = vmax.f32 %v388, 0.0
      %v416 = vmax.f32 %v407, 0.0
      %417 = vrot.lane.b32.xlu0 %v409, 17
      %v418 = vpop.permute.xlu0 %417
      %419 = vrot.lane.b32.xlu0 %v411, 17
      %v420 = vpop.permute.xlu0 %419
      %421 = vrot.lane.b32.xlu0 %v413, 17
      %v422 = vpop.permute.xlu0 %421
      %423 = vrot.lane.b32.xlu0 %v415, 17
      %v424 = vpop.permute.xlu0 %423
      %425 = vrot.lane.b32.xlu0 %v410, 17
      %v426 = vpop.permute.xlu0 %425
      %427 = vrot.lane.b32.xlu0 %v412, 17
      %v428 = vpop.permute.xlu0 %427
      %429 = vrot.lane.b32.xlu0 %v414, 17
      %v430 = vpop.permute.xlu0 %429
      %431 = vrot.lane.b32.xlu0 %v416, 17
      %v432 = vpop.permute.xlu0 %431
      %v433 = vlaneseq
      %v434 = vand.u32 %v433, 127
      %vm435 = vcmp.lt.s32.totalorder %v434, 17
      %v436 = vsel %vm435, %v418, %v426
      %v437 = vsel %vm435, %v420, %v428
      %v438 = vsel %vm435, %v422, %v430
      %v439 = vsel %vm435, %v424, %v432
      %v440 = vsel %vm435, %v426, %v418
      %v441 = vsel %vm435, %v428, %v420
      %v442 = vsel %vm435, %v430, %v422
      %v443 = vsel %vm435, %v432, %v424
      %v444 = vld [vmem:[%s6] ss:$8 sm:$0x3]
      %v446 = vperm.slane %v444, 0
      %v447 = vperm.slane %v444, 1
      %v450 = vmul.f32 %v440, %v446
      %v451 = vmul.f32 %v436, %v447
      %v452 = vmul.f32 %v441, %v446
      %v453 = vmul.f32 %v437, %v447
      %v454 = vmul.f32 %v442, %v446
      %v455 = vmul.f32 %v438, %v447
      %v456 = vmul.f32 %v443, %v446
      %v457 = vmul.f32 %v439, %v447
      %v458 = vld [vmem:[%s5] sm:$0xf]
      %v459 = vpack.c.bf16 %v452, %v450
      %v460 = vpack.c.bf16 %v453, %v451
      %v461 = vpack.c.bf16 %v456, %v454
      %v462 = vpack.c.bf16 %v457, %v455
      %463 = vrot.lane.b32.xlu0 %v409, 16
      %v464 = vpop.permute.xlu0 %463
      %465 = vrot.lane.b32.xlu0 %v411, 16
      %v466 = vpop.permute.xlu0 %465
      %467 = vrot.lane.b32.xlu0 %v413, 16
      %v468 = vpop.permute.xlu0 %467
      %469 = vrot.lane.b32.xlu0 %v415, 16
      %v470 = vpop.permute.xlu0 %469
      %471 = vrot.lane.b32.xlu0 %v410, 16
      %v472 = vpop.permute.xlu0 %471
      %473 = vrot.lane.b32.xlu0 %v412, 16
      %v474 = vpop.permute.xlu0 %473
      %475 = vrot.lane.b32.xlu0 %v414, 16
      %v476 = vpop.permute.xlu0 %475
      %477 = vrot.lane.b32.xlu0 %v416, 16
      %v478 = vpop.permute.xlu0 %477
      %vm479 = vcmp.lt.s32.totalorder %v434, 16
      %v480 = vsel %vm479, %v464, %v472
      %v481 = vsel %vm479, %v466, %v474
      %v482 = vsel %vm479, %v468, %v476
      %v483 = vsel %vm479, %v470, %v478
      %v484 = vsel %vm479, %v472, %v464
      %v485 = vsel %vm479, %v474, %v466
      %v486 = vsel %vm479, %v476, %v468
      %v487 = vsel %vm479, %v478, %v470
      %s488 = scalar_lea.vmem %s6, 1
      %v489 = vld [vmem:[%s488] ss:$8 sm:$0x3]
      %v491 = vperm.slane %v489, 0
      %v492 = vperm.slane %v489, 1
      %v495 = vmul.f32 %v484, %v491
      %v496 = vmul.f32 %v480, %v492
      %v497 = vmul.f32 %v485, %v491
      %v498 = vmul.f32 %v481, %v492
      %v499 = vmul.f32 %v486, %v491
      %v500 = vmul.f32 %v482, %v492
      %v501 = vmul.f32 %v487, %v491
      %v502 = vmul.f32 %v483, %v492
      %s503 = scalar_lea.vmem %s5, 4
      %v504 = vld [vmem:[%s503] sm:$0xf]
      %v505 = vpack.c.bf16 %v497, %v495
      %v506 = vpack.c.bf16 %v498, %v496
      %v507 = vpack.c.bf16 %v501, %v499
      %v508 = vpack.c.bf16 %v502, %v500
      %vm509 = vcmask 261120
      %v511 = vsel %vm509, %v504, 0
      %513 = vmatpush.bf16.msra.mxu0 0
      %514 = vmatpush.bf16.msra.mxu0 0
      %515 = vmatpush.bf16.msra.mxu0 0
      %516 = vmatpush.bf16.msra.mxu0 0
      %517 = vmatpush.bf16.msra.mxu0 0
      %518 = vmatpush.bf16.msra.mxu0 0
      %519 = vmatpush.bf16.msra.mxu0 %v507
      %520 = vmatpush.bf16.msra.mxu0 %v505
      %521 = vmatmul.bf16.gmra.mxu0 %v511
      %v522 = vpop.f32.mrf.mxu0
      %v523 = vadd.f32 0.0, %v522
      %v524 = vpop.f32.mrf.mxu0
      %525 = vdwg.mxu0
      %526 = vmatpush.bf16.msra.mxu0 0
      %527 = vmatpush.bf16.msra.mxu0 0
      %528 = vmatpush.bf16.msra.mxu0 0
      %529 = vmatpush.bf16.msra.mxu0 0
      %530 = vmatpush.bf16.msra.mxu0 0
      %531 = vmatpush.bf16.msra.mxu0 0
      %532 = vmatpush.bf16.msra.mxu0 %v508
      %533 = vmatpush.bf16.msra.mxu0 %v506
      %534 = vmatmul.bf16.gmra.mxu0 %v511
      %v535 = vpop.f32.mrf.mxu0
      %v536 = vadd.f32 0.0, %v535
      %v537 = vpop.f32.mrf.mxu0
      %538 = vdwg.mxu0
      %v540 = vsel %vm509, %v458, 0
      %542 = vmatpush.bf16.msra.mxu0 0
      %543 = vmatpush.bf16.msra.mxu0 0
      %544 = vmatpush.bf16.msra.mxu0 0
      %545 = vmatpush.bf16.msra.mxu0 0
      %546 = vmatpush.bf16.msra.mxu0 0
      %547 = vmatpush.bf16.msra.mxu0 0
      %548 = vmatpush.bf16.msra.mxu0 %v461
      %549 = vmatpush.bf16.msra.mxu0 %v459
      %550 = vmatmul.bf16.gmra.mxu0 %v540
      %v551 = vpop.f32.mrf.mxu0
      %v552 = vadd.f32 %v523, %v551
      %v553 = vpop.f32.mrf.mxu0
      %554 = vdwg.mxu0
      %555 = vmatpush.bf16.msra.mxu0 0
      %556 = vmatpush.bf16.msra.mxu0 0
      %557 = vmatpush.bf16.msra.mxu0 0
      %558 = vmatpush.bf16.msra.mxu0 0
      %559 = vmatpush.bf16.msra.mxu0 0
      %560 = vmatpush.bf16.msra.mxu0 0
      %561 = vmatpush.bf16.msra.mxu0 %v462
      %562 = vmatpush.bf16.msra.mxu0 %v460
      %563 = vmatmul.bf16.gmra.mxu0 %v540
      %v564 = vpop.f32.mrf.mxu0
      %v565 = vadd.f32 %v536, %v564
      %v566 = vpop.f32.mrf.mxu0
      %567 = vdwg.mxu0
      %568 = vrot.lane.b32.xlu0 %v409, 15
      %v569 = vpop.permute.xlu0 %568
      %570 = vrot.lane.b32.xlu0 %v411, 15
      %v571 = vpop.permute.xlu0 %570
      %572 = vrot.lane.b32.xlu0 %v413, 15
      %v573 = vpop.permute.xlu0 %572
      %574 = vrot.lane.b32.xlu0 %v415, 15
      %v575 = vpop.permute.xlu0 %574
      %576 = vrot.lane.b32.xlu0 %v410, 15
      %v577 = vpop.permute.xlu0 %576
      %578 = vrot.lane.b32.xlu0 %v412, 15
      %v579 = vpop.permute.xlu0 %578
      %580 = vrot.lane.b32.xlu0 %v414, 15
      %v581 = vpop.permute.xlu0 %580
      %582 = vrot.lane.b32.xlu0 %v416, 15
      %v583 = vpop.permute.xlu0 %582
      %vm584 = vcmp.lt.s32.totalorder %v434, 15
      %v585 = vsel %vm584, %v569, %v577
      %v586 = vsel %vm584, %v571, %v579
      %v587 = vsel %vm584, %v573, %v581
      %v588 = vsel %vm584, %v575, %v583
      %v589 = vsel %vm584, %v577, %v569
      %v590 = vsel %vm584, %v579, %v571
      %v591 = vsel %vm584, %v581, %v573
      %v592 = vsel %vm584, %v583, %v575
      %s593 = scalar_lea.vmem %s6, 2
      %v594 = vld [vmem:[%s593] ss:$8 sm:$0x3]
      %v596 = vperm.slane %v594, 0
      %v597 = vperm.slane %v594, 1
      %v600 = vmul.f32 %v589, %v596
      %v601 = vmul.f32 %v585, %v597
      %v602 = vmul.f32 %v590, %v596
      %v603 = vmul.f32 %v586, %v597
      %v604 = vmul.f32 %v591, %v596
      %v605 = vmul.f32 %v587, %v597
      %v606 = vmul.f32 %v592, %v596
      %v607 = vmul.f32 %v588, %v597
      %s608 = scalar_lea.vmem %s5, 8
      %v609 = vld [vmem:[%s608] sm:$0xf]
      %v610 = vpack.c.bf16 %v602, %v600
      %v611 = vpack.c.bf16 %v603, %v601
      %v612 = vpack.c.bf16 %v606, %v604
      %v613 = vpack.c.bf16 %v607, %v605
      %v615 = vsel %vm509, %v609, 0
      %617 = vmatpush.bf16.msra.mxu0 0
      %618 = vmatpush.bf16.msra.mxu0 0
      %619 = vmatpush.bf16.msra.mxu0 0
      %620 = vmatpush.bf16.msra.mxu0 0
      %621 = vmatpush.bf16.msra.mxu0 0
      %622 = vmatpush.bf16.msra.mxu0 0
      %623 = vmatpush.bf16.msra.mxu0 %v612
      %624 = vmatpush.bf16.msra.mxu0 %v610
      %625 = vmatmul.bf16.gmra.mxu0 %v615
      %v626 = vpop.f32.mrf.mxu0
      %v627 = vadd.f32 0.0, %v626
      %v628 = vpop.f32.mrf.mxu0
      %629 = vdwg.mxu0
      %630 = vmatpush.bf16.msra.mxu0 0
      %631 = vmatpush.bf16.msra.mxu0 0
      %632 = vmatpush.bf16.msra.mxu0 0
      %633 = vmatpush.bf16.msra.mxu0 0
      %634 = vmatpush.bf16.msra.mxu0 0
      %635 = vmatpush.bf16.msra.mxu0 0
      %636 = vmatpush.bf16.msra.mxu0 %v613
      %637 = vmatpush.bf16.msra.mxu0 %v611
      %638 = vmatmul.bf16.gmra.mxu0 %v615
      %v639 = vpop.f32.mrf.mxu0
      %v640 = vadd.f32 0.0, %v639
      %v641 = vpop.f32.mrf.mxu0
      %642 = vdwg.mxu0
      %v643 = vadd.f32 %v552, %v627
      %v644 = vadd.f32 %v565, %v640
      %645 = vrot.lane.b32.xlu0 %v409, 1
      %v646 = vpop.permute.xlu0 %645
      %647 = vrot.lane.b32.xlu0 %v411, 1
      %v648 = vpop.permute.xlu0 %647
      %649 = vrot.lane.b32.xlu0 %v413, 1
      %v650 = vpop.permute.xlu0 %649
      %651 = vrot.lane.b32.xlu0 %v415, 1
      %v652 = vpop.permute.xlu0 %651
      %653 = vrot.lane.b32.xlu0 %v410, 1
      %v654 = vpop.permute.xlu0 %653
      %655 = vrot.lane.b32.xlu0 %v412, 1
      %v656 = vpop.permute.xlu0 %655
      %657 = vrot.lane.b32.xlu0 %v414, 1
      %v658 = vpop.permute.xlu0 %657
      %659 = vrot.lane.b32.xlu0 %v416, 1
      %v660 = vpop.permute.xlu0 %659
      %vm661 = vcmp.lt.s32.totalorder %v434, 1
      %v662 = vsel %vm661, %v646, %v654
      %v663 = vsel %vm661, %v648, %v656
      %v664 = vsel %vm661, %v650, %v658
      %v665 = vsel %vm661, %v652, %v660
      %v666 = vsel %vm661, %v654, %v646
      %v667 = vsel %vm661, %v656, %v648
      %v668 = vsel %vm661, %v658, %v650
      %v669 = vsel %vm661, %v660, %v652
      %s670 = scalar_lea.vmem %s6, 3
      %v671 = vld [vmem:[%s670] ss:$8 sm:$0x3]
      %v673 = vperm.slane %v671, 0
      %v674 = vperm.slane %v671, 1
      %v677 = vmul.f32 %v666, %v673
      %v678 = vmul.f32 %v662, %v674
      %v679 = vmul.f32 %v667, %v673
      %v680 = vmul.f32 %v663, %v674
      %v681 = vmul.f32 %v668, %v673
      %v682 = vmul.f32 %v664, %v674
      %v683 = vmul.f32 %v669, %v673
      %v684 = vmul.f32 %v665, %v674
      %s685 = scalar_lea.vmem %s5, 12
      %v686 = vld [vmem:[%s685] sm:$0xf]
      %v687 = vpack.c.bf16 %v679, %v677
      %v688 = vpack.c.bf16 %v680, %v678
      %v689 = vpack.c.bf16 %v683, %v681
      %v690 = vpack.c.bf16 %v684, %v682
      %v692 = vsel %vm509, %v686, 0
      %694 = vmatpush.bf16.msra.mxu0 0
      %695 = vmatpush.bf16.msra.mxu0 0
      %696 = vmatpush.bf16.msra.mxu0 0
      %697 = vmatpush.bf16.msra.mxu0 0
      %698 = vmatpush.bf16.msra.mxu0 0
      %699 = vmatpush.bf16.msra.mxu0 0
      %700 = vmatpush.bf16.msra.mxu0 %v689
      %701 = vmatpush.bf16.msra.mxu0 %v687
      %702 = vmatmul.bf16.gmra.mxu0 %v692
      %v703 = vpop.f32.mrf.mxu0
      %v704 = vadd.f32 0.0, %v703
      %v705 = vpop.f32.mrf.mxu0
      %706 = vdwg.mxu0
      %707 = vmatpush.bf16.msra.mxu0 0
      %708 = vmatpush.bf16.msra.mxu0 0
      %709 = vmatpush.bf16.msra.mxu0 0
      %710 = vmatpush.bf16.msra.mxu0 0
      %711 = vmatpush.bf16.msra.mxu0 0
      %712 = vmatpush.bf16.msra.mxu0 0
      %713 = vmatpush.bf16.msra.mxu0 %v690
      %714 = vmatpush.bf16.msra.mxu0 %v688
      %715 = vmatmul.bf16.gmra.mxu0 %v692
      %v716 = vpop.f32.mrf.mxu0
      %v717 = vadd.f32 0.0, %v716
      %v718 = vpop.f32.mrf.mxu0
      %719 = vdwg.mxu0
      %v720 = vadd.f32 %v643, %v704
      %v721 = vadd.f32 %v644, %v717
      %s722 = scalar_lea.vmem %s5, 16
      %v723 = vld [vmem:[%s722] sm:$0xf]
      %v724 = vpack.c.bf16 %v411, %v409
      %v725 = vpack.c.bf16 %v412, %v410
      %v726 = vpack.c.bf16 %v415, %v413
      %v727 = vpack.c.bf16 %v416, %v414
      %v729 = vsel %vm509, %v723, 0
      %731 = vmatpush.bf16.msra.mxu0 0
      %732 = vmatpush.bf16.msra.mxu0 0
      %733 = vmatpush.bf16.msra.mxu0 0
      %734 = vmatpush.bf16.msra.mxu0 0
      %735 = vmatpush.bf16.msra.mxu0 0
      %736 = vmatpush.bf16.msra.mxu0 0
      %737 = vmatpush.bf16.msra.mxu0 %v726
      %738 = vmatpush.bf16.msra.mxu0 %v724
      %739 = vmatmul.bf16.gmra.mxu0 %v729
      %v740 = vpop.f32.mrf.mxu0
      %v741 = vadd.f32 0.0, %v740
      %v742 = vpop.f32.mrf.mxu0
      %743 = vdwg.mxu0
      %744 = vmatpush.bf16.msra.mxu0 0
      %745 = vmatpush.bf16.msra.mxu0 0
      %746 = vmatpush.bf16.msra.mxu0 0
      %747 = vmatpush.bf16.msra.mxu0 0
      %748 = vmatpush.bf16.msra.mxu0 0
      %749 = vmatpush.bf16.msra.mxu0 0
      %750 = vmatpush.bf16.msra.mxu0 %v727
      %751 = vmatpush.bf16.msra.mxu0 %v725
      %752 = vmatmul.bf16.gmra.mxu0 %v729
      %v753 = vpop.f32.mrf.mxu0
      %v754 = vadd.f32 0.0, %v753
      %v755 = vpop.f32.mrf.mxu0
      %756 = vdwg.mxu0
      %v757 = vadd.f32 %v720, %v741
      %v758 = vadd.f32 %v721, %v754
      %759 = vrot.lane.b32.xlu0 %v409, 127
      %v760 = vpop.permute.xlu0 %759
      %761 = vrot.lane.b32.xlu0 %v411, 127
      %v762 = vpop.permute.xlu0 %761
      %763 = vrot.lane.b32.xlu0 %v413, 127
      %v764 = vpop.permute.xlu0 %763
      %765 = vrot.lane.b32.xlu0 %v415, 127
      %v766 = vpop.permute.xlu0 %765
      %767 = vrot.lane.b32.xlu0 %v410, 127
      %v768 = vpop.permute.xlu0 %767
      %769 = vrot.lane.b32.xlu0 %v412, 127
      %v770 = vpop.permute.xlu0 %769
      %771 = vrot.lane.b32.xlu0 %v414, 127
      %v772 = vpop.permute.xlu0 %771
      %773 = vrot.lane.b32.xlu0 %v416, 127
      %v774 = vpop.permute.xlu0 %773
      %vm775 = vcmp.lt.s32.totalorder %v434, 127
      %v776 = vsel %vm775, %v760, %v768
      %v777 = vsel %vm775, %v762, %v770
      %v778 = vsel %vm775, %v764, %v772
      %v779 = vsel %vm775, %v766, %v774
      %v780 = vsel %vm775, %v768, %v760
      %v781 = vsel %vm775, %v770, %v762
      %v782 = vsel %vm775, %v772, %v764
      %v783 = vsel %vm775, %v774, %v766
      %s784 = scalar_lea.vmem %s6, 5
      %v785 = vld [vmem:[%s784] ss:$8 sm:$0x3]
      %v787 = vperm.slane %v785, 0
      %v788 = vperm.slane %v785, 1
      %v791 = vmul.f32 %v776, %v787
      %v792 = vmul.f32 %v780, %v788
      %v793 = vmul.f32 %v777, %v787
      %v794 = vmul.f32 %v781, %v788
      %v795 = vmul.f32 %v778, %v787
      %v796 = vmul.f32 %v782, %v788
      %v797 = vmul.f32 %v779, %v787
      %v798 = vmul.f32 %v783, %v788
      %s799 = scalar_lea.vmem %s5, 20
      %v800 = vld [vmem:[%s799] sm:$0xf]
      %v801 = vpack.c.bf16 %v793, %v791
      %v802 = vpack.c.bf16 %v794, %v792
      %v803 = vpack.c.bf16 %v797, %v795
      %v804 = vpack.c.bf16 %v798, %v796
      %v806 = vsel %vm509, %v800, 0
      %808 = vmatpush.bf16.msra.mxu0 0
      %809 = vmatpush.bf16.msra.mxu0 0
      %810 = vmatpush.bf16.msra.mxu0 0
      %811 = vmatpush.bf16.msra.mxu0 0
      %812 = vmatpush.bf16.msra.mxu0 0
      %813 = vmatpush.bf16.msra.mxu0 0
      %814 = vmatpush.bf16.msra.mxu0 %v803
      %815 = vmatpush.bf16.msra.mxu0 %v801
      %816 = vmatmul.bf16.gmra.mxu0 %v806
      %v817 = vpop.f32.mrf.mxu0
      %v818 = vadd.f32 0.0, %v817
      %v819 = vpop.f32.mrf.mxu0
      %820 = vdwg.mxu0
      %821 = vmatpush.bf16.msra.mxu0 0
      %822 = vmatpush.bf16.msra.mxu0 0
      %823 = vmatpush.bf16.msra.mxu0 0
      %824 = vmatpush.bf16.msra.mxu0 0
      %825 = vmatpush.bf16.msra.mxu0 0
      %826 = vmatpush.bf16.msra.mxu0 0
      %827 = vmatpush.bf16.msra.mxu0 %v804
      %828 = vmatpush.bf16.msra.mxu0 %v802
      %829 = vmatmul.bf16.gmra.mxu0 %v806
      %v830 = vpop.f32.mrf.mxu0
      %v831 = vadd.f32 0.0, %v830
      %v832 = vpop.f32.mrf.mxu0
      %833 = vdwg.mxu0
      %v834 = vadd.f32 %v757, %v818
      %v835 = vadd.f32 %v758, %v831
      %836 = vrot.lane.b32.xlu0 %v409, 113
      %v837 = vpop.permute.xlu0 %836
      %838 = vrot.lane.b32.xlu0 %v411, 113
      %v839 = vpop.permute.xlu0 %838
      %840 = vrot.lane.b32.xlu0 %v413, 113
      %v841 = vpop.permute.xlu0 %840
      %842 = vrot.lane.b32.xlu0 %v415, 113
      %v843 = vpop.permute.xlu0 %842
      %844 = vrot.lane.b32.xlu0 %v410, 113
      %v845 = vpop.permute.xlu0 %844
      %846 = vrot.lane.b32.xlu0 %v412, 113
      %v847 = vpop.permute.xlu0 %846
      %848 = vrot.lane.b32.xlu0 %v414, 113
      %v849 = vpop.permute.xlu0 %848
      %850 = vrot.lane.b32.xlu0 %v416, 113
      %v851 = vpop.permute.xlu0 %850
      %vm852 = vcmp.lt.s32.totalorder %v434, 113
      %v853 = vsel %vm852, %v837, %v845
      %v854 = vsel %vm852, %v839, %v847
      %v855 = vsel %vm852, %v841, %v849
      %v856 = vsel %vm852, %v843, %v851
      %v857 = vsel %vm852, %v845, %v837
      %v858 = vsel %vm852, %v847, %v839
      %v859 = vsel %vm852, %v849, %v841
      %v860 = vsel %vm852, %v851, %v843
      %s861 = scalar_lea.vmem %s6, 6
      %v862 = vld [vmem:[%s861] ss:$8 sm:$0x3]
      %v864 = vperm.slane %v862, 0
      %v865 = vperm.slane %v862, 1
      %v868 = vmul.f32 %v853, %v864
      %v869 = vmul.f32 %v857, %v865
      %v870 = vmul.f32 %v854, %v864
      %v871 = vmul.f32 %v858, %v865
      %v872 = vmul.f32 %v855, %v864
      %v873 = vmul.f32 %v859, %v865
      %v874 = vmul.f32 %v856, %v864
      %v875 = vmul.f32 %v860, %v865
      %s876 = scalar_lea.vmem %s5, 24
      %v877 = vld [vmem:[%s876] sm:$0xf]
      %v878 = vpack.c.bf16 %v870, %v868
      %v879 = vpack.c.bf16 %v871, %v869
      %v880 = vpack.c.bf16 %v874, %v872
      %v881 = vpack.c.bf16 %v875, %v873
      %v883 = vsel %vm509, %v877, 0
      %885 = vmatpush.bf16.msra.mxu0 0
      %886 = vmatpush.bf16.msra.mxu0 0
      %887 = vmatpush.bf16.msra.mxu0 0
      %888 = vmatpush.bf16.msra.mxu0 0
      %889 = vmatpush.bf16.msra.mxu0 0
      %890 = vmatpush.bf16.msra.mxu0 0
      %891 = vmatpush.bf16.msra.mxu0 %v880
      %892 = vmatpush.bf16.msra.mxu0 %v878
      %893 = vmatmul.bf16.gmra.mxu0 %v883
      %v894 = vpop.f32.mrf.mxu0
      %v895 = vadd.f32 0.0, %v894
      %v896 = vpop.f32.mrf.mxu0
      %897 = vdwg.mxu0
      %898 = vmatpush.bf16.msra.mxu0 0
      %899 = vmatpush.bf16.msra.mxu0 0
      %900 = vmatpush.bf16.msra.mxu0 0
      %901 = vmatpush.bf16.msra.mxu0 0
      %902 = vmatpush.bf16.msra.mxu0 0
      %903 = vmatpush.bf16.msra.mxu0 0
      %904 = vmatpush.bf16.msra.mxu0 %v881
      %905 = vmatpush.bf16.msra.mxu0 %v879
      %906 = vmatmul.bf16.gmra.mxu0 %v883
      %v907 = vpop.f32.mrf.mxu0
      %v908 = vadd.f32 0.0, %v907
      %v909 = vpop.f32.mrf.mxu0
      %910 = vdwg.mxu0
      %v911 = vadd.f32 %v834, %v895
      %v912 = vadd.f32 %v835, %v908
      %913 = vrot.lane.b32.xlu0 %v409, 112
      %v914 = vpop.permute.xlu0 %913
      %915 = vrot.lane.b32.xlu0 %v411, 112
      %v916 = vpop.permute.xlu0 %915
      %917 = vrot.lane.b32.xlu0 %v413, 112
      %v918 = vpop.permute.xlu0 %917
      %919 = vrot.lane.b32.xlu0 %v415, 112
      %v920 = vpop.permute.xlu0 %919
      %921 = vrot.lane.b32.xlu0 %v410, 112
      %v922 = vpop.permute.xlu0 %921
      %923 = vrot.lane.b32.xlu0 %v412, 112
      %v924 = vpop.permute.xlu0 %923
      %925 = vrot.lane.b32.xlu0 %v414, 112
      %v926 = vpop.permute.xlu0 %925
      %927 = vrot.lane.b32.xlu0 %v416, 112
      %v928 = vpop.permute.xlu0 %927
      %vm929 = vcmp.lt.s32.totalorder %v434, 112
      %v930 = vsel %vm929, %v914, %v922
      %v931 = vsel %vm929, %v916, %v924
      %v932 = vsel %vm929, %v918, %v926
      %v933 = vsel %vm929, %v920, %v928
      %v934 = vsel %vm929, %v922, %v914
      %v935 = vsel %vm929, %v924, %v916
      %v936 = vsel %vm929, %v926, %v918
      %v937 = vsel %vm929, %v928, %v920
      %s938 = scalar_lea.vmem %s6, 7
      %v939 = vld [vmem:[%s938] ss:$8 sm:$0x3]
      %v941 = vperm.slane %v939, 0
      %v942 = vperm.slane %v939, 1
      %v945 = vmul.f32 %v930, %v941
      %v946 = vmul.f32 %v934, %v942
      %v947 = vmul.f32 %v931, %v941
      %v948 = vmul.f32 %v935, %v942
      %v949 = vmul.f32 %v932, %v941
      %v950 = vmul.f32 %v936, %v942
      %v951 = vmul.f32 %v933, %v941
      %v952 = vmul.f32 %v937, %v942
      %s953 = scalar_lea.vmem %s5, 28
      %v954 = vld [vmem:[%s953] sm:$0xf]
      %v955 = vpack.c.bf16 %v947, %v945
      %v956 = vpack.c.bf16 %v948, %v946
      %v957 = vpack.c.bf16 %v951, %v949
      %v958 = vpack.c.bf16 %v952, %v950
      %v960 = vsel %vm509, %v954, 0
      %962 = vmatpush.bf16.msra.mxu0 0
      %963 = vmatpush.bf16.msra.mxu0 0
      %964 = vmatpush.bf16.msra.mxu0 0
      %965 = vmatpush.bf16.msra.mxu0 0
      %966 = vmatpush.bf16.msra.mxu0 0
      %967 = vmatpush.bf16.msra.mxu0 0
      %968 = vmatpush.bf16.msra.mxu0 %v957
      %969 = vmatpush.bf16.msra.mxu0 %v955
      %970 = vmatmul.bf16.gmra.mxu0 %v960
      %v971 = vpop.f32.mrf.mxu0
      %v972 = vadd.f32 0.0, %v971
      %v973 = vpop.f32.mrf.mxu0
      %974 = vdwg.mxu0
      %975 = vmatpush.bf16.msra.mxu0 0
      %976 = vmatpush.bf16.msra.mxu0 0
      %977 = vmatpush.bf16.msra.mxu0 0
      %978 = vmatpush.bf16.msra.mxu0 0
      %979 = vmatpush.bf16.msra.mxu0 0
      %980 = vmatpush.bf16.msra.mxu0 0
      %981 = vmatpush.bf16.msra.mxu0 %v958
      %982 = vmatpush.bf16.msra.mxu0 %v956
      %983 = vmatmul.bf16.gmra.mxu0 %v960
      %v984 = vpop.f32.mrf.mxu0
      %v985 = vadd.f32 0.0, %v984
      %v986 = vpop.f32.mrf.mxu0
      %987 = vdwg.mxu0
      %v988 = vadd.f32 %v911, %v972
      %v989 = vadd.f32 %v912, %v985
      %990 = vrot.lane.b32.xlu0 %v409, 111
      %v991 = vpop.permute.xlu0 %990
      %992 = vrot.lane.b32.xlu0 %v411, 111
      %v993 = vpop.permute.xlu0 %992
      %994 = vrot.lane.b32.xlu0 %v413, 111
      %v995 = vpop.permute.xlu0 %994
      %996 = vrot.lane.b32.xlu0 %v415, 111
      %v997 = vpop.permute.xlu0 %996
      %998 = vrot.lane.b32.xlu0 %v410, 111
      %v999 = vpop.permute.xlu0 %998
      %1000 = vrot.lane.b32.xlu0 %v412, 111
      %v1001 = vpop.permute.xlu0 %1000
      %1002 = vrot.lane.b32.xlu0 %v414, 111
      %v1003 = vpop.permute.xlu0 %1002
      %1004 = vrot.lane.b32.xlu0 %v416, 111
      %v1005 = vpop.permute.xlu0 %1004
      %vm1006 = vcmp.lt.s32.totalorder %v434, 111
      %v1007 = vsel %vm1006, %v991, %v999
      %v1008 = vsel %vm1006, %v993, %v1001
      %v1009 = vsel %vm1006, %v995, %v1003
      %v1010 = vsel %vm1006, %v997, %v1005
      %v1011 = vsel %vm1006, %v999, %v991
      %v1012 = vsel %vm1006, %v1001, %v993
      %v1013 = vsel %vm1006, %v1003, %v995
      %v1014 = vsel %vm1006, %v1005, %v997
      %s1015 = scalar_lea.vmem %s6, 16
      %v1016 = vld [vmem:[%s1015] ss:$8 sm:$0x3]
      %v1018 = vperm.slane %v1016, 0
      %v1019 = vperm.slane %v1016, 1
      %v1022 = vmul.f32 %v1007, %v1018
      %v1023 = vmul.f32 %v1011, %v1019
      %v1024 = vmul.f32 %v1008, %v1018
      %v1025 = vmul.f32 %v1012, %v1019
      %v1026 = vmul.f32 %v1009, %v1018
      %v1027 = vmul.f32 %v1013, %v1019
      %v1028 = vmul.f32 %v1010, %v1018
      %v1029 = vmul.f32 %v1014, %v1019
      %s1030 = scalar_lea.vmem %s5, 32
      %v1031 = vld [vmem:[%s1030] sm:$0xf]
      %v1032 = vpack.c.bf16 %v1024, %v1022
      %v1033 = vpack.c.bf16 %v1025, %v1023
      %v1034 = vpack.c.bf16 %v1028, %v1026
      %v1035 = vpack.c.bf16 %v1029, %v1027
      %v1037 = vsel %vm509, %v1031, 0
      %1039 = vmatpush.bf16.msra.mxu0 0
      %1040 = vmatpush.bf16.msra.mxu0 0
      %1041 = vmatpush.bf16.msra.mxu0 0
      %1042 = vmatpush.bf16.msra.mxu0 0
      %1043 = vmatpush.bf16.msra.mxu0 0
      %1044 = vmatpush.bf16.msra.mxu0 0
      %1045 = vmatpush.bf16.msra.mxu0 %v1034
      %1046 = vmatpush.bf16.msra.mxu0 %v1032
      %1047 = vmatmul.bf16.gmra.mxu0 %v1037
      %v1048 = vpop.f32.mrf.mxu0
      %v1049 = vadd.f32 0.0, %v1048
      %v1050 = vpop.f32.mrf.mxu0
      %1051 = vdwg.mxu0
      %1052 = vmatpush.bf16.msra.mxu0 0
      %1053 = vmatpush.bf16.msra.mxu0 0
      %1054 = vmatpush.bf16.msra.mxu0 0
      %1055 = vmatpush.bf16.msra.mxu0 0
      %1056 = vmatpush.bf16.msra.mxu0 0
      %1057 = vmatpush.bf16.msra.mxu0 0
      %1058 = vmatpush.bf16.msra.mxu0 %v1035
      %1059 = vmatpush.bf16.msra.mxu0 %v1033
      %1060 = vmatmul.bf16.gmra.mxu0 %v1037
      %v1061 = vpop.f32.mrf.mxu0
      %v1062 = vadd.f32 0.0, %v1061
      %v1063 = vpop.f32.mrf.mxu0
      %1064 = vdwg.mxu0
      %v1065 = vadd.f32 %v988, %v1049
      %v1066 = vadd.f32 %v989, %v1062
      %1067 = vst [vmem:[%s278 + $0x20] sm:$0xff] %v1065
      %1068 = vst [vmem:[%s278 + $0x28] sm:$0xff] %v1066
      %p1069 = scmp.lt.s32.totalorder %s18, 1
      %s1070 = scalar_select %p1069, %s18, 1
      %s1071 = smul.addr %s1070, 6
      %s1072 = smul.addr %s1071, 8
      %s1073 = scalar_lea.vmem %s7, %s1072
      // Predicated region
      $region49: #{bottleneck_forward.1} parent=47 // pred_check
        %p1074 = pneg %p188
      $region50: #{bottleneck_forward.1} parent=47 // pred_check_branch
        %1076 = sbr.rel (%p1074) target = $region52
      $region51: #{bottleneck_forward.1} parent=47 // pred_region
        _
      $region52: #{bottleneck_forward.1} parent=47 // pred_fallthru
        _
    $region48: #{bottleneck_forward.1} parent=5 // pred_fallthru
      _
    %p1077 = scmp.le.s32.totalorder 2, %s13
    // Predicated region
    $region53: #{bottleneck_forward.1} parent=5 // pred_check
      %p1078 = pneg %p1077
    $region54: #{bottleneck_forward.1} parent=5 // pred_check_branch
      %1080 = sbr.rel (%p1078) target = $region56
    $region55: #{bottleneck_forward.1} parent=5 // pred_region
      %s1081 = ssub.s32 %s13, 2
      // Predicated region
      $region57: #{bottleneck_forward.1} parent=55 // pred_check
        %p1082 = pneg %p194
      $region58: #{bottleneck_forward.1} parent=55 // pred_check_branch
        %1084 = sbr.rel (%p1082) target = $region60
      $region59: #{bottleneck_forward.1} parent=55 // pred_region
        %p1085 = scmp.lt.s32.totalorder %s19, 1
        %s1086 = scalar_select %p1085, %s19, 1
        %s1087 = smul.addr %s1086, 6
        %s1088 = smul.addr %s1087, 8
        %s1089 = scalar_lea.vmem %s7, %s1088
      $region60: #{bottleneck_forward.1} parent=55 // pred_fallthru
        _
    $region56: #{bottleneck_forward.1} parent=5 // pred_fallthru
      _
  $region6: #{bottleneck_forward.1} parent=0 // loop_footer
    %s17 = sadd.s32 1, %s13
  $region7: #{bottleneck_forward.1} parent=0 // loop_footer_branch
    %12 = sbr.rel target = $region3
  $region8: #{bottleneck_forward.1} parent=0 // loop_exit
    _

</llo_original>
